<compile_context>
chip_gen: v7x
topology: tpu7x:2x2x1
jax: 0.10.0
libtpu: 0.0.40
codegen_flags: <defaults>
</compile_context>

<pallas_src>
import functools
import math

import jax
import jax.numpy as jnp
from jax import lax
from jax.experimental import pallas as pl
from jax.experimental.pallas import tpu as pltpu


def _mhsa_kernel(xq_ref, xkv_ref, w_ref, b_ref, o_ref, *,
                 n_heads, d_head, hidden_d, single_q_tile, compute_dtype):
    f32 = jnp.float32
    D = hidden_d
    cast = (lambda a: a) if compute_dtype is None else (
        lambda a: a.astype(compute_dtype))

    w = cast(w_ref[...])              # (D, 3D)  fused [Wq | Wk | Wv]
    b = b_ref[...].astype(f32)        # (1, 3D)  fused [bq | bk | bv]

    if single_q_tile:
        # One fused lane-dense projection matmul: (S, D) @ (D, 3D) -> (S, 3D)
        x = cast(xkv_ref[0])
        qkv = jnp.dot(x, w, preferred_element_type=f32) + b
        q_all = qkv[:, :D]
        k_all = qkv[:, D:2 * D]
        v_all = qkv[:, 2 * D:]
    else:
        # Query tile only needs the Q columns; K/V use the full-sequence block.
        xq = cast(xq_ref[0])
        xkv = cast(xkv_ref[0])
        q_all = jnp.dot(xq, w[:, :D], preferred_element_type=f32) + b[:, :D]
        kv = jnp.dot(xkv, w[:, D:], preferred_element_type=f32) + b[:, D:]
        k_all = kv[:, :D]
        v_all = kv[:, D:]

    # bf16 MXU operands (when requested); softmax stays in f32 below.
    q_all = cast(q_all)
    k_all = cast(k_all)
    v_all = cast(v_all)

    scale = 1.0 / math.sqrt(d_head)
    head_outs = []
    for h in range(n_heads):                      # static unroll over heads
        sl = slice(h * d_head, (h + 1) * d_head)
        q_h = q_all[:, sl]                        # (tq, d_head)
        k_h = k_all[:, sl]                        # (S,  d_head)
        v_h = v_all[:, sl]                        # (S,  d_head)

        # q_h @ k_h^T via dot_general contracting the last dims (no explicit .T)
        scores = lax.dot_general(
            q_h, k_h, (((1,), (1,)), ((), ())),
            preferred_element_type=f32) * scale   # (tq, S), f32

        # Numerically stable softmax in f32; approx reciprocal hits the EUP.
        m = jnp.max(scores, axis=-1, keepdims=True)
        e = jnp.exp(scores - m)
        denom = jnp.sum(e, axis=-1, keepdims=True)
        probs = e * pl.reciprocal(denom, approx=True)

        head_outs.append(
            jnp.dot(cast(probs), v_h, preferred_element_type=f32))

    # Single lane-dense (tq, D) store per grid step.
    o_ref[0] = jnp.concatenate(head_outs, axis=-1).astype(o_ref.dtype)


def mhsa_forward(x, wq, bq, wk, bk, wv, bv, *, n_heads,
                 compute_dtype=None, max_q_tile=512):
    """x: (N, S, D); weights (D, D) right-multiply; biases (1, D)."""
    N, S, D = x.shape
    assert D % n_heads == 0
    d_head = D // n_heads

    # Fuse the three projections into one (D, 3D) weight and a (1, 3D) bias.
    w_qkv = jnp.concatenate([wq, wk, wv], axis=1)
    b_qkv = jnp.concatenate([bq, bk, bv], axis=1)

    # Tile the query dimension when S is large (bounds the (tq, S) score
    # matrix in VMEM); for small S use a single tile (tq == S).
    if S <= max_q_tile or S % max_q_tile != 0:
        tq = S
    else:
        tq = max_q_tile
    n_q_tiles = S // tq
    single_q_tile = n_q_tiles == 1

    kernel = functools.partial(
        _mhsa_kernel, n_heads=n_heads, d_head=d_head, hidden_d=D,
        single_q_tile=single_q_tile, compute_dtype=compute_dtype)

    in_specs = [
        pl.BlockSpec((1, tq, D), lambda b, qi: (b, qi, 0)),   # x (query tile)
        pl.BlockSpec((1, S, D), lambda b, qi: (b, 0, 0)),     # x (full seq, K/V)
        pl.BlockSpec((D, 3 * D), lambda b, qi: (0, 0)),       # fused W_qkv
        pl.BlockSpec((1, 3 * D), lambda b, qi: (0, 0)),       # fused b_qkv
    ]
    out_specs = pl.BlockSpec((1, tq, D), lambda b, qi: (b, qi, 0))

    return pl.pallas_call(
        kernel,
        out_shape=jax.ShapeDtypeStruct((N, S, D), x.dtype),
        grid_spec=pltpu.PrefetchScalarGridSpec(
            num_scalar_prefetch=0,
            grid=(N, n_q_tiles),
            in_specs=in_specs,
            out_specs=out_specs,
        ),
        compiler_params=pltpu.CompilerParams(
            # Batch and q-tiles are independent -> both parallel (megacore /
            # dual-TC on v7x gets work even for small or odd N).
            dimension_semantics=("parallel", "parallel"),
            # NOTE: for large S/D, raise vmem_limit_bytes here and shrink
            # max_q_tile on v7x (64 MiB VMEM vs 128 MiB on v5e/v6e).
        ),
    )(x, x, w_qkv, b_qkv)


def mhsa_reference(x, wq, bq, wk, bk, wv, bv, *, n_heads):
    """Pure-JAX reference mirroring the PyTorch forward pass."""
    N, S, D = x.shape
    d_head = D // n_heads
    q = (x @ wq + bq).reshape(N, S, n_heads, d_head).transpose(0, 2, 1, 3)
    k = (x @ wk + bk).reshape(N, S, n_heads, d_head).transpose(0, 2, 1, 3)
    v = (x @ wv + bv).reshape(N, S, n_heads, d_head).transpose(0, 2, 1, 3)
    scores = jnp.einsum("nhqd,nhkd->nhqk", q, k) / math.sqrt(d_head)
    probs = jax.nn.softmax(scores, axis=-1)
    out = jnp.einsum("nhqk,nhkd->nhqd", probs, v)
    return out.transpose(0, 2, 1, 3).reshape(N, S, D)


if __name__ == "__main__":
    # Small shapes consistent with the module: batch=2, seq=8, hidden=32, heads=2
    N, S, D, H = 2, 8, 32, 2
    key = jax.random.PRNGKey(0)
    kx, kq, kbq, kk, kbk, kv, kbv = jax.random.split(key, 7)

    bound = 1.0 / math.sqrt(D)
    x = jax.random.normal(kx, (N, S, D), dtype=jnp.float32)
    wq = jax.random.uniform(kq, (D, D), jnp.float32, -bound, bound)
    bq = jax.random.uniform(kbq, (1, D), jnp.float32, -bound, bound)
    wk = jax.random.uniform(kk, (D, D), jnp.float32, -bound, bound)
    bk = jax.random.uniform(kbk, (1, D), jnp.float32, -bound, bound)
    wv = jax.random.uniform(kv, (D, D), jnp.float32, -bound, bound)
    bv = jax.random.uniform(kbv, (1, D), jnp.float32, -bound, bound)

    ref = mhsa_reference(x, wq, bq, wk, bk, wv, bv, n_heads=H)

    # f32 MXU operands; tolerance allows for the EUP approx-reciprocal softmax.
    out = jax.block_until_ready(mhsa_forward(x, wq, bq, wk, bk, wv, bv, n_heads=H))
    assert out.shape == (N, S, D)
    assert jnp.allclose(out, ref, atol=1e-2, rtol=1e-2), "f32 mismatch vs reference"

    # bf16 MXU operands / f32 accumulation (v6e/v7x fast path); loose tolerance
    # covers bf16 rounding of the matmul operands.
    out_bf16 = jax.block_until_ready(
        mhsa_forward(x, wq, bq, wk, bk, wv, bv, n_heads=H,
                     compute_dtype=jnp.bfloat16))
    assert out_bf16.shape == (N, S, D)
    assert jnp.allclose(out_bf16.astype(jnp.float32), ref, atol=0.1, rtol=0.1), \
        "bf16 mismatch vs reference"

    print("KERNEL_OK")
</pallas_src>

<mosaic_0001>
module attributes {stable_mosaic.version = 11 : i64} {
  func.func @_mhsa_kernel(%arg0: i32, %arg1: i32, %arg2: memref<1x8x32xf32, #tpu.memory_space<vmem>>, %arg3: memref<1x8x32xf32, #tpu.memory_space<vmem>>, %arg4: memref<32x96xf32, #tpu.memory_space<vmem>>, %arg5: memref<1x96xf32, #tpu.memory_space<vmem>>, %arg6: memref<1x8x32xf32, #tpu.memory_space<vmem>>) attributes {dimension_semantics = [#tpu.dimension_semantics<parallel>, #tpu.dimension_semantics<parallel>], iteration_bounds = array<i64: 2, 1>, scalar_prefetch = 0 : i64, scratch_operands = 0 : i64, tpu.core_type = #tpu.core_type<tc>, window_params = [{transform_indices = @transform_0, window_bounds = array<i64: 1, 8, 32>}, {transform_indices = @transform_1, window_bounds = array<i64: 1, 8, 32>}, {pipeline_mode = #tpu.pipeline_mode<synchronous>, transform_indices = @transform_2, window_bounds = array<i64: 32, 96>}, {pipeline_mode = #tpu.pipeline_mode<synchronous>, transform_indices = @transform_3, window_bounds = array<i64: 1, 96>}, {transform_indices = @transform_4, window_bounds = array<i64: 1, 8, 32>}]} {
    %c0 = arith.constant 0 : index
    %c0_0 = arith.constant 0 : index
    %0 = vector.load %arg4[%c0, %c0_0] : memref<32x96xf32, #tpu.memory_space<vmem>>, vector<32x96xf32>
    %c0_1 = arith.constant 0 : index
    %c0_2 = arith.constant 0 : index
    %1 = vector.load %arg5[%c0_1, %c0_2] : memref<1x96xf32, #tpu.memory_space<vmem>>, vector<1x96xf32>
    %c0_3 = arith.constant 0 : index
    %c0_4 = arith.constant 0 : index
    %c0_5 = arith.constant 0 : index
    %2 = vector.load %arg3[%c0_3, %c0_4, %c0_5] : memref<1x8x32xf32, #tpu.memory_space<vmem>>, vector<1x8x32xf32>
    %3 = vector.shape_cast %2 : vector<1x8x32xf32> to vector<8x32xf32>
    %cst = arith.constant dense<0.000000e+00> : vector<8x96xf32>
    %4 = tpu.matmul %3, %0, %cst {dimension_numbers = #tpu.dot_dimension_numbers<[1], [0], [0], [1], [0, 0, 1, 1], [], []>} : vector<8x32xf32>, vector<32x96xf32>, vector<8x96xf32> -> vector<8x96xf32>
    %5 = vector.broadcast %1 : vector<1x96xf32> to vector<8x96xf32>
    %6 = arith.addf %4, %5 : vector<8x96xf32>
    %7 = vector.extract_strided_slice %6 {offsets = [0, 0], sizes = [8, 32], strides = [1, 1]} : vector<8x96xf32> to vector<8x32xf32>
    %8 = vector.extract_strided_slice %6 {offsets = [0, 32], sizes = [8, 32], strides = [1, 1]} : vector<8x96xf32> to vector<8x32xf32>
    %9 = vector.extract_strided_slice %6 {offsets = [0, 64], sizes = [8, 32], strides = [1, 1]} : vector<8x96xf32> to vector<8x32xf32>
    %10 = vector.extract_strided_slice %7 {offsets = [0, 0], sizes = [8, 16], strides = [1, 1]} : vector<8x32xf32> to vector<8x16xf32>
    %11 = vector.extract_strided_slice %8 {offsets = [0, 0], sizes = [8, 16], strides = [1, 1]} : vector<8x32xf32> to vector<8x16xf32>
    %12 = vector.extract_strided_slice %9 {offsets = [0, 0], sizes = [8, 16], strides = [1, 1]} : vector<8x32xf32> to vector<8x16xf32>
    %cst_6 = arith.constant dense<0.000000e+00> : vector<8x8xf32>
    %13 = tpu.matmul %10, %11, %cst_6 {dimension_numbers = #tpu.dot_dimension_numbers<[1], [1], [0], [0], [0, 0, 1, 0], [], []>} : vector<8x16xf32>, vector<8x16xf32>, vector<8x8xf32> -> vector<8x8xf32>
    %cst_7 = arith.constant 2.500000e-01 : f32
    %14 = vector.broadcast %cst_7 : f32 to vector<8x8xf32>
    %15 = arith.mulf %13, %14 : vector<8x8xf32>
    %cst_8 = arith.constant dense<0xFF800000> : vector<8xf32>
    %16 = vector.multi_reduction <maximumf>, %15, %cst_8 [1] : vector<8x8xf32> to vector<8xf32>
    %17 = vector.shape_cast %16 : vector<8xf32> to vector<8x1xf32>
    %18 = vector.broadcast %17 : vector<8x1xf32> to vector<8x8xf32>
    %19 = arith.subf %15, %18 : vector<8x8xf32>
    %20 = math.exp %19 : vector<8x8xf32>
    %cst_9 = arith.constant dense<0.000000e+00> : vector<8xf32>
    %21 = vector.multi_reduction <add>, %20, %cst_9 [1] : vector<8x8xf32> to vector<8xf32>
    %22 = vector.shape_cast %21 : vector<8xf32> to vector<8x1xf32>
    %23 = tpu.reciprocal %22 {approx = true} : vector<8x1xf32> -> vector<8x1xf32>
    %24 = vector.broadcast %23 : vector<8x1xf32> to vector<8x8xf32>
    %25 = arith.mulf %20, %24 : vector<8x8xf32>
    %cst_10 = arith.constant dense<0.000000e+00> : vector<8x16xf32>
    %26 = tpu.matmul %25, %12, %cst_10 {dimension_numbers = #tpu.dot_dimension_numbers<[1], [0], [0], [1], [0, 0, 1, 1], [], []>} : vector<8x8xf32>, vector<8x16xf32>, vector<8x16xf32> -> vector<8x16xf32>
    %27 = vector.extract_strided_slice %7 {offsets = [0, 16], sizes = [8, 16], strides = [1, 1]} : vector<8x32xf32> to vector<8x16xf32>
    %28 = vector.extract_strided_slice %8 {offsets = [0, 16], sizes = [8, 16], strides = [1, 1]} : vector<8x32xf32> to vector<8x16xf32>
    %29 = vector.extract_strided_slice %9 {offsets = [0, 16], sizes = [8, 16], strides = [1, 1]} : vector<8x32xf32> to vector<8x16xf32>
    %cst_11 = arith.constant dense<0.000000e+00> : vector<8x8xf32>
    %30 = tpu.matmul %27, %28, %cst_11 {dimension_numbers = #tpu.dot_dimension_numbers<[1], [1], [0], [0], [0, 0, 1, 0], [], []>} : vector<8x16xf32>, vector<8x16xf32>, vector<8x8xf32> -> vector<8x8xf32>
    %cst_12 = arith.constant 2.500000e-01 : f32
    %31 = vector.broadcast %cst_12 : f32 to vector<8x8xf32>
    %32 = arith.mulf %30, %31 : vector<8x8xf32>
    %cst_13 = arith.constant dense<0xFF800000> : vector<8xf32>
    %33 = vector.multi_reduction <maximumf>, %32, %cst_13 [1] : vector<8x8xf32> to vector<8xf32>
    %34 = vector.shape_cast %33 : vector<8xf32> to vector<8x1xf32>
    %35 = vector.broadcast %34 : vector<8x1xf32> to vector<8x8xf32>
    %36 = arith.subf %32, %35 : vector<8x8xf32>
    %37 = math.exp %36 : vector<8x8xf32>
    %cst_14 = arith.constant dense<0.000000e+00> : vector<8xf32>
    %38 = vector.multi_reduction <add>, %37, %cst_14 [1] : vector<8x8xf32> to vector<8xf32>
    %39 = vector.shape_cast %38 : vector<8xf32> to vector<8x1xf32>
    %40 = tpu.reciprocal %39 {approx = true} : vector<8x1xf32> -> vector<8x1xf32>
    %41 = vector.broadcast %40 : vector<8x1xf32> to vector<8x8xf32>
    %42 = arith.mulf %37, %41 : vector<8x8xf32>
    %cst_15 = arith.constant dense<0.000000e+00> : vector<8x16xf32>
    %43 = tpu.matmul %42, %29, %cst_15 {dimension_numbers = #tpu.dot_dimension_numbers<[1], [0], [0], [1], [0, 0, 1, 1], [], []>} : vector<8x8xf32>, vector<8x16xf32>, vector<8x16xf32> -> vector<8x16xf32>
    %44 = tpu.concatenate %26, %43 in 1 : vector<8x16xf32>, vector<8x16xf32> -> vector<8x32xf32>
    %c0_16 = arith.constant 0 : index
    %c0_17 = arith.constant 0 : index
    %c0_18 = arith.constant 0 : index
    %45 = vector.load %arg6[%c0_16, %c0_17, %c0_18] : memref<1x8x32xf32, #tpu.memory_space<vmem>>, vector<1x8x32xf32>
    %46 = vector.shape_cast %45 : vector<1x8x32xf32> to vector<8x32xf32>
    %47 = vector.shape_cast %44 : vector<8x32xf32> to vector<1x8x32xf32>
    tpu.vector_store %arg6[%c0_16, %c0_17, %c0_18], %47 {strides = array<i32>} : memref<1x8x32xf32, #tpu.memory_space<vmem>>, vector<1x8x32xf32>,
    return
  }
  func.func @transform_0(%arg0: i32, %arg1: i32) -> (i32, i32, i32) {
    %c0_i32 = arith.constant 0 : i32
    %c0_i32_0 = arith.constant 0 : i32
    return %arg0, %arg1, %c0_i32 : i32, i32, i32
  }
  func.func @transform_1(%arg0: i32, %arg1: i32) -> (i32, i32, i32) {
    %c0_i32 = arith.constant 0 : i32
    %c0_i32_0 = arith.constant 0 : i32
    %c0_i32_1 = arith.constant 0 : i32
    return %arg0, %c0_i32, %c0_i32_0 : i32, i32, i32
  }
  func.func @transform_2(%arg0: i32, %arg1: i32) -> (i32, i32) {
    %c0_i32 = arith.constant 0 : i32
    %c0_i32_0 = arith.constant 0 : i32
    %c0_i32_1 = arith.constant 0 : i32
    return %c0_i32, %c0_i32_0 : i32, i32
  }
  func.func @transform_3(%arg0: i32, %arg1: i32) -> (i32, i32) {
    %c0_i32 = arith.constant 0 : i32
    %c0_i32_0 = arith.constant 0 : i32
    %c0_i32_1 = arith.constant 0 : i32
    return %c0_i32, %c0_i32_0 : i32, i32
  }
  func.func @transform_4(%arg0: i32, %arg1: i32) -> (i32, i32, i32) {
    %c0_i32 = arith.constant 0 : i32
    %c0_i32_0 = arith.constant 0 : i32
    return %arg0, %arg1, %c0_i32 : i32, i32, i32
  }
}

</mosaic_0001>

<llo_original>
// kernel: tpu_custom_call.1
$region0: #{tpu_custom_call.1}
  #allocation0 [shape = 'u32[]', space=smem, size = 0x4, offset = 0x4, fixed_abs, tag = 'smem constant byte address 0x4 - core index']
  #allocation1 [shape = 'u32[144,128]{1,0:T(1,128)}', space=vmem, size = 0x12000, scoped, tag = 'internal scratch']
  %s0 = inlined_call_operand.hbm [shape: f32[2,8,32], index: 0, kind: input, shape index: {}]
  %s1 = inlined_call_operand.hbm [shape: f32[2,8,32], index: 1, kind: input, shape index: {}]
  %s2 = inlined_call_operand.hbm [shape: f32[32,96], index: 2, kind: input, shape index: {}]
  %s3 = inlined_call_operand.vmem [shape: f32[1,96], index: 3, kind: input, shape index: {}]
  %s4 = inlined_call_operand.hbm [shape: f32[2,8,32], index: 4, kind: output, shape index: {}]
  %s5 = sld [smem:[#allocation0]]
  $region61: #{tpu_custom_call.1} parent=0
    _
  %s7 = ssub.s32 1, %s5
  %s8 = scalar_select 0, %s7, %s5
  $region1: #{tpu_custom_call.1} parent=0
    #allocation2 [shape = 'u8[8192]{0}', space=vmem, size = 0x2000, scoped, tag = 'input window, operand 0']
    #allocation3 [shape = 's32[2]{0}', space=sflag, size = 0x8, scoped, tag = 'scoped memory for tpu_custom_call.1']
    #allocation4 [shape = 's32[2]{0}', space=sflag, size = 0x8, scoped, tag = 'scoped memory for tpu_custom_call.1']
    #allocation5 [shape = 'u8[8192]{0}', space=vmem, size = 0x2000, scoped, tag = 'input window, operand 1']
    #allocation6 [shape = 's32[2]{0}', space=sflag, size = 0x8, scoped, tag = 'scoped memory for tpu_custom_call.1']
    #allocation7 [shape = 'u8[16384]{0}', space=vmem, size = 0x4000, scoped, tag = 'input window, operand 2, single buffered']
    #allocation8 [shape = 'u8[8192]{0}', space=vmem, size = 0x2000, scoped, tag = 'output window, operand 0']
    %9 = vsyncpa [#allocation3], 0
    %s10 = scalar_lea.sflag [#allocation3], 1
    %11 = vsyncpa %s10, 0
    %12 = vsyncpa [#allocation6], 0
    %s13 = scalar_lea.sflag [#allocation6], 1
    %14 = vsyncpa %s13, 0
    %15 = vsyncpa [#allocation4], 0
    %s16 = scalar_lea.sflag [#allocation4], 1
    %17 = vsyncpa %s16, 0
    loop: start=0, step=1, limit=4
    $region2: #{tpu_custom_call.1} parent=1 // loop_pre_header
      _
    $region3: #{tpu_custom_call.1} parent=1 // loop_header
      %s19 = sphi 0, %s23
      %p20 = scmp.ge.s32.totalorder %s19, 4
      %s26 = sphi 0, %s38
      %s27 = sphi 0, %s34
      %s28 = sphi 0, %s26
      %s29 = sphi 0, %s27
      %s30 = sphi 0, %s28
      %s31 = sphi 0, %s29
      %s43 = sphi 0, %s45
      %s46 = sphi 0, %s43
      %s47 = sphi 0, %s46
      %s63 = sphi 0, %s47
      %s69 = sphi 0, %s71
      %s72 = sphi 0, %s69
      %s73 = sphi 0, %s72
      %s89 = sphi 0, %s73
      %s93 = sphi 0, %s93
      %s95 = sphi 0, %s93
      %s96 = sphi 0, %s95
      %s110 = sphi 0, %s96
      %s114 = sphi 0, %s114
      %s116 = sphi 0, %s114
      %s117 = sphi 0, %s116
      %s131 = sphi 0, %s117
      %s139 = sphi 0, %s141
      %s142 = sphi 0, %s139
      %s143 = sphi 0, %s142
      %s159 = sphi 0, %s143
    $region4: #{tpu_custom_call.1} parent=1 // loop_header_branch
      %22 = sbr.rel (%p20) target = $region8
    $region5: #{tpu_custom_call.1} parent=1 // loop_body
      %s24 = ssub.s32 %s19, 1
      %s25 = ssub.s32 %s19, 2
      %s32 = sadd.s32 1, %s27
      %p33 = scmp.ge.s32.totalorder %s32, 1
      %s34 = scalar_select %p33, 0, %s32
      %s35 = sadd.s32 1, %s26
      %s36 = scalar_select %p33, %s35, %s26
      %p37 = scmp.ge.s32.totalorder %s36, 2
      %s38 = scalar_select %p37, 0, %s36
      %s39 = ssub.s32 %s26, %s38
      %s40 = ssub.s32 %s27, %s34
      %s41 = sor.u32 %s39, %s40
      %p42 = scmp.eq.s32.totalorder %s41, 0
      %s44 = sadd.s32 %s43, 1
      %s45 = scalar_select %p42, %s43, %s44
      %p48 = pneg %p42
      %p49 = scmp.eq.s32.totalorder %s19, 1
      %p50 = por %p48, %p49
      %p51 = scmp.ne.s32.totalorder %s43, %s46
      %p52 = scmp.eq.s32.totalorder %s19, 0
      %p53 = por %p51, %p52
      %p54 = scmp.ne.s32.totalorder %s43, %s46
      %p55 = scmp.eq.s32.totalorder %s24, 1
      %p56 = por %p54, %p55
      %p57 = scmp.ne.s32.totalorder %s46, %s47
      %p58 = scmp.eq.s32.totalorder %s24, 0
      %p59 = por %p57, %p58
      %p60 = scmp.ne.s32.totalorder %s46, %s47
      %p61 = scmp.eq.s32.totalorder %s25, 1
      %p62 = por %p60, %p61
      %p64 = scmp.ne.s32.totalorder %s47, %s63
      %p65 = scmp.eq.s32.totalorder %s25, 0
      %p66 = por %p64, %p65
      %s67 = ssub.s32 %s26, %s38
      %p68 = scmp.eq.s32.totalorder %s67, 0
      %s70 = sadd.s32 %s69, 1
      %s71 = scalar_select %p68, %s69, %s70
      %p74 = pneg %p68
      %p75 = scmp.eq.s32.totalorder %s19, 1
      %p76 = por %p74, %p75
      %p77 = scmp.ne.s32.totalorder %s69, %s72
      %p78 = scmp.eq.s32.totalorder %s19, 0
      %p79 = por %p77, %p78
      %p80 = scmp.ne.s32.totalorder %s69, %s72
      %p81 = scmp.eq.s32.totalorder %s24, 1
      %p82 = por %p80, %p81
      %p83 = scmp.ne.s32.totalorder %s72, %s73
      %p84 = scmp.eq.s32.totalorder %s24, 0
      %p85 = por %p83, %p84
      %p86 = scmp.ne.s32.totalorder %s72, %s73
      %p87 = scmp.eq.s32.totalorder %s25, 1
      %p88 = por %p86, %p87
      %p90 = scmp.ne.s32.totalorder %s73, %s89
      %p91 = scmp.eq.s32.totalorder %s25, 0
      %p92 = por %p90, %p91
      %s94 = sadd.s32 %s93, 1
      %p97 = scmp.eq.s32.totalorder %s19, 1
      %p98 = scmp.ne.s32.totalorder %s93, %s95
      %p99 = scmp.eq.s32.totalorder %s19, 0
      %p100 = por %p98, %p99
      %p101 = scmp.ne.s32.totalorder %s93, %s95
      %p102 = scmp.eq.s32.totalorder %s24, 1
      %p103 = por %p101, %p102
      %p104 = scmp.ne.s32.totalorder %s95, %s96
      %p105 = scmp.eq.s32.totalorder %s24, 0
      %p106 = por %p104, %p105
      %p107 = scmp.ne.s32.totalorder %s95, %s96
      %p108 = scmp.eq.s32.totalorder %s25, 1
      %p109 = por %p107, %p108
      %p111 = scmp.ne.s32.totalorder %s96, %s110
      %p112 = scmp.eq.s32.totalorder %s25, 0
      %p113 = por %p111, %p112
      %s115 = sadd.s32 %s114, 1
      %p118 = scmp.eq.s32.totalorder %s19, 1
      %p119 = scmp.ne.s32.totalorder %s114, %s116
      %p120 = scmp.eq.s32.totalorder %s19, 0
      %p121 = por %p119, %p120
      %p122 = scmp.ne.s32.totalorder %s114, %s116
      %p123 = scmp.eq.s32.totalorder %s24, 1
      %p124 = por %p122, %p123
      %p125 = scmp.ne.s32.totalorder %s116, %s117
      %p126 = scmp.eq.s32.totalorder %s24, 0
      %p127 = por %p125, %p126
      %p128 = scmp.ne.s32.totalorder %s116, %s117
      %p129 = scmp.eq.s32.totalorder %s25, 1
      %p130 = por %p128, %p129
      %p132 = scmp.ne.s32.totalorder %s117, %s131
      %p133 = scmp.eq.s32.totalorder %s25, 0
      %p134 = por %p132, %p133
      %s135 = ssub.s32 %s26, %s38
      %s136 = ssub.s32 %s27, %s34
      %s137 = sor.u32 %s135, %s136
      %p138 = scmp.eq.s32.totalorder %s137, 0
      %s140 = sadd.s32 %s139, 1
      %s141 = scalar_select %p138, %s139, %s140
      %p144 = pneg %p138
      %p145 = scmp.eq.s32.totalorder %s19, 1
      %p146 = por %p144, %p145
      %p147 = scmp.ne.s32.totalorder %s139, %s142
      %p148 = scmp.eq.s32.totalorder %s19, 0
      %p149 = por %p147, %p148
      %p150 = scmp.ne.s32.totalorder %s139, %s142
      %p151 = scmp.eq.s32.totalorder %s24, 1
      %p152 = por %p150, %p151
      %p153 = scmp.ne.s32.totalorder %s142, %s143
      %p154 = scmp.eq.s32.totalorder %s24, 0
      %p155 = por %p153, %p154
      %p156 = scmp.ne.s32.totalorder %s142, %s143
      %p157 = scmp.eq.s32.totalorder %s25, 1
      %p158 = por %p156, %p157
      %p160 = scmp.ne.s32.totalorder %s143, %s159
      %p161 = scmp.eq.s32.totalorder %s25, 0
      %p162 = por %p160, %p161
      %p163 = scmp.le.s32.totalorder 1, %s19
      %p164 = scmp.lt.s32.totalorder %s19, 3
      %p165 = pnand %p163, %p164
      %p166 = pneg %p165
      // Predicated region
      $region9: #{tpu_custom_call.1} parent=5 // pred_check
        _
      $region10: #{tpu_custom_call.1} parent=5 // pred_check_branch
        %168 = sbr.rel (%p165) target = $region12
      $region11: #{tpu_custom_call.1} parent=5 // pred_region
        %s169 = ssub.s32 %s19, 1
        // Predicated region
        $region13: #{tpu_custom_call.1} parent=11 // pred_check
          %p170 = pneg %p106
        $region14: #{tpu_custom_call.1} parent=11 // pred_check_branch
          %172 = sbr.rel (%p170) target = $region16
        $region15: #{tpu_custom_call.1} parent=11 // pred_region
          %s174 = ssub.s32 512, 512
          %175 = vsyncadd [#allocation6], %s174
          %s176 = sshll.u32 [#allocation7], 4
          %s177 = int_to_ptr.vmem [resolvable:$true] %s176
          %182 = dma.hbm_to_vmem [thread:$0]  %s2, 512, %s177, [#allocation6], 128, 128, 8
        $region16: #{tpu_custom_call.1} parent=11 // pred_fallthru
          _
        // Predicated region
        $region17: #{tpu_custom_call.1} parent=11 // pred_check
          %p183 = pneg %p127
        $region18: #{tpu_custom_call.1} parent=11 // pred_check_branch
          %185 = sbr.rel (%p183) target = $region20
        $region19: #{tpu_custom_call.1} parent=11 // pred_region
          _
        $region20: #{tpu_custom_call.1} parent=11 // pred_fallthru
          _
      $region12: #{tpu_custom_call.1} parent=5 // pred_fallthru
        _
      %p186 = scmp.lt.s32.totalorder %s19, 2
      // Predicated region
      $region21: #{tpu_custom_call.1} parent=5 // pred_check
        %p187 = pneg %p186
      $region22: #{tpu_custom_call.1} parent=5 // pred_check_branch
        %189 = sbr.rel (%p187) target = $region24
      $region23: #{tpu_custom_call.1} parent=5 // pred_region
        // Predicated region
        $region25: #{tpu_custom_call.1} parent=23 // pred_check
          %p190 = pneg %p53
        $region26: #{tpu_custom_call.1} parent=23 // pred_check_branch
          %192 = sbr.rel (%p190) target = $region28
        $region27: #{tpu_custom_call.1} parent=23 // pred_region
          %s193 = sand.u32 %s43, 1
          %s194 = scalar_lea.sflag [#allocation3], %s193
          %s195 = sand.u32 %s43, 1
          %s196 = smul.addr %s195, 8
          %s197 = scalar_lea.vmem [#allocation2], %s196
          %s199 = ssub.s32 128, 128
          %200 = vsyncadd %s194, %s199
          %s201 = sadd.s32 %s27, %s26
          %s202 = smul.addr %s201, 128
          %s203 = scalar_lea.hbm %s0, %s202
          %s205 = sshll.u32 %s197, 4
          %s206 = int_to_ptr.vmem [resolvable:$true] %s205
          %208 = dma.hbm_to_vmem [thread:$0]  %s203, 128, %s206, %s194
        $region28: #{tpu_custom_call.1} parent=23 // pred_fallthru
          _
        // Predicated region
        $region29: #{tpu_custom_call.1} parent=23 // pred_check
          %p209 = pneg %p79
        $region30: #{tpu_custom_call.1} parent=23 // pred_check_branch
          %211 = sbr.rel (%p209) target = $region32
        $region31: #{tpu_custom_call.1} parent=23 // pred_region
          %s212 = sand.u32 %s19, 1
          %s213 = scalar_lea.sflag [#allocation6], %s212
          %s214 = sand.u32 %s69, 1
          %s215 = smul.addr %s214, 8
          %s216 = scalar_lea.vmem [#allocation5], %s215
          %s218 = ssub.s32 128, 128
          %219 = vsyncadd %s213, %s218
          %s220 = smul.addr %s26, 128
          %s221 = scalar_lea.hbm %s1, %s220
          %s223 = sshll.u32 %s216, 4
          %s224 = int_to_ptr.vmem [resolvable:$true] %s223
          %226 = dma.hbm_to_vmem [thread:$0]  %s221, 128, %s224, %s213
        $region32: #{tpu_custom_call.1} parent=23 // pred_fallthru
          _
      $region24: #{tpu_custom_call.1} parent=5 // pred_fallthru
        _
      %p227 = scmp.le.s32.totalorder 1, %s19
      %p228 = scmp.lt.s32.totalorder %s19, 3
      %p229 = pnand %p227, %p228
      %p230 = pneg %p229
      // Predicated region
      $region33: #{tpu_custom_call.1} parent=5 // pred_check
        _
      $region34: #{tpu_custom_call.1} parent=5 // pred_check_branch
        %232 = sbr.rel (%p229) target = $region36
      $region35: #{tpu_custom_call.1} parent=5 // pred_region
        %s233 = ssub.s32 %s19, 1
        %s234 = sand.u32 %s46, 1
        %s235 = scalar_lea.sflag [#allocation3], %s234
        %s236 = sand.u32 %s46, 1
        %s237 = smul.addr %s236, 8
        %s238 = scalar_lea.vmem [#allocation2], %s237
        // Predicated region
        $region37: #{tpu_custom_call.1} parent=35 // pred_check
          %p239 = pneg %p59
        $region38: #{tpu_custom_call.1} parent=35 // pred_check_branch
          %241 = sbr.rel (%p239) target = $region40
        $region39: #{tpu_custom_call.1} parent=35 // pred_region
          %242 = dma.done %s235, 128
        $region40: #{tpu_custom_call.1} parent=35 // pred_fallthru
          _
        %s243 = sand.u32 %s24, 1
        %s244 = scalar_lea.sflag [#allocation6], %s243
        %s245 = sand.u32 %s72, 1
        %s246 = smul.addr %s245, 8
        %s247 = scalar_lea.vmem [#allocation5], %s246
        // Predicated region
        $region41: #{tpu_custom_call.1} parent=35 // pred_check
          %p248 = pneg %p85
        $region42: #{tpu_custom_call.1} parent=35 // pred_check_branch
          %250 = sbr.rel (%p248) target = $region44
        $region43: #{tpu_custom_call.1} parent=35 // pred_region
          %251 = dma.done %s244, 128
        $region44: #{tpu_custom_call.1} parent=35 // pred_fallthru
          _
        // Predicated region
        $region45: #{tpu_custom_call.1} parent=35 // pred_check
          %p252 = pneg %p106
        $region46: #{tpu_custom_call.1} parent=35 // pred_check_branch
          %254 = sbr.rel (%p252) target = $region48
        $region47: #{tpu_custom_call.1} parent=35 // pred_region
          %255 = dma.done [#allocation6], 512
        $region48: #{tpu_custom_call.1} parent=35 // pred_fallthru
          _
        %s256 = sand.u32 %s46, 1
        %s257 = scalar_lea.sflag [#allocation3], %s256
        %s258 = sand.u32 %s46, 1
        %s259 = smul.addr %s258, 8
        %s260 = scalar_lea.vmem [#allocation2], %s259
        %p261 = pneg %p59
        %p262 = pneg %p56
        %s263 = sand.u32 %s24, 1
        %s264 = scalar_lea.sflag [#allocation6], %s263
        %s265 = sand.u32 %s72, 1
        %s266 = smul.addr %s265, 8
        %s267 = scalar_lea.vmem [#allocation5], %s266
        %p268 = pneg %p85
        %p269 = pneg %p82
        %p270 = pneg %p106
        %p271 = pneg %p103
        %p272 = pneg %p127
        %p273 = pneg %p124
        %p274 = pneg %p155
        %p275 = pneg %p152
        %s276 = sand.u32 %s142, 1
        %s277 = scalar_lea.sflag [#allocation4], %s276
        %s278 = sand.u32 %s142, 1
        %s279 = smul.addr %s278, 8
        %s280 = scalar_lea.vmem [#allocation8], %s279
        %v281 = vld [vmem:[#allocation7] sm:$0xff]
        %v282 = vld [vmem:[#allocation7 + $0x8] sm:$0xff]
        %v283 = vld [vmem:[#allocation7 + $0x10] sm:$0xff]
        %v284 = vld [vmem:[#allocation7 + $0x18] sm:$0xff]
        %v285 = vld [vmem:[%s3] sm:$0x1]
        %v286 = vld [vmem:[%s247] sm:$0xff]
        %v288 = vlaneseq
        %v289 = vshrl.u32 %v288, 7
        %v290 = vsub.s32 0, %v289
        %v291 = vrot.slane %v285, %v290
        %vm293 = vcmask 261120
        %v295 = vsel %vm293, %v286, 0
        %297 = vmatprep.subr.mxu0 0.0
        %298 = vmatpush1.msra.mxu0 %v281
        %299 = vmatprep.subr.mxu0 0.0
        %300 = vmatpush1.msra.mxu0 %v282
        %301 = vmatprep.subr.mxu0 0.0
        %302 = vmatpush1.msra.mxu0 %v283
        %303 = vmatprep.subr.mxu0 0.0
        %304 = vmatpush1.msra.mxu0 %v284
        %305 = vmatprep.subr.mxu0 0.0
        %306 = vmatpush1.msra.mxu0 0.0
        %307 = vmatprep.subr.mxu0 0.0
        %308 = vmatpush1.msra.mxu0 0.0
        %309 = vmatprep.subr.mxu0 0.0
        %310 = vmatpush1.msra.mxu0 0.0
        %311 = vmatprep.subr.mxu0 0.0
        %312 = vmatpush1.msra.mxu0 0.0
        %313 = vmatprep.subr.mxu0 0.0
        %314 = vmatpush1.msra.mxu0 0.0
        %315 = vmatprep.subr.mxu0 0.0
        %316 = vmatpush1.msra.mxu0 0.0
        %317 = vmatprep.subr.mxu0 0.0
        %318 = vmatpush1.msra.mxu0 0.0
        %319 = vmatprep.subr.mxu0 0.0
        %320 = vmatpush1.msra.mxu0 0.0
        %321 = vmatprep.subr.mxu0 0.0
        %322 = vmatpush1.msra.mxu0 0.0
        %323 = vmatprep.subr.mxu0 0.0
        %324 = vmatpush1.msra.mxu0 0.0
        %325 = vmatprep.subr.mxu0 0.0
        %326 = vmatpush1.msra.mxu0 0.0
        %327 = vmatprep.subr.mxu0 0.0
        %328 = vmatpush1.msra.mxu0 0.0
        %329 = vmatprep.subr.mxu0 0.0
        %330 = vmatpush1.msra.mxu0 0.0
        %331 = vmatprep.subr.mxu0 0.0
        %332 = vmatpush1.msra.mxu0 0.0
        %333 = vmatprep.subr.mxu0 0.0
        %334 = vmatpush1.msra.mxu0 0.0
        %335 = vmatprep.subr.mxu0 0.0
        %336 = vmatpush1.msra.mxu0 0.0
        %337 = vmatprep.subr.mxu0 0.0
        %338 = vmatpush1.msra.mxu0 0.0
        %339 = vmatprep.subr.mxu0 0.0
        %340 = vmatpush1.msra.mxu0 0.0
        %341 = vmatprep.subr.mxu0 0.0
        %342 = vmatpush1.msra.mxu0 0.0
        %343 = vmatprep.subr.mxu0 0.0
        %344 = vmatpush1.msra.mxu0 0.0
        %345 = vmatprep.subr.mxu0 0.0
        %346 = vmatpush1.msra.mxu0 0.0
        %347 = vmatprep.subr.mxu0 0.0
        %348 = vmatpush1.msra.mxu0 0.0
        %349 = vmatprep.subr.mxu0 0.0
        %350 = vmatpush1.msra.mxu0 0.0
        %351 = vmatprep.subr.mxu0 0.0
        %352 = vmatpush1.msra.mxu0 0.0
        %353 = vmatprep.subr.mxu0 0.0
        %354 = vmatpush1.msra.mxu0 0.0
        %355 = vmatprep.subr.mxu0 0.0
        %356 = vmatpush1.msra.mxu0 0.0
        %357 = vmatprep.subr.mxu0 0.0
        %358 = vmatpush1.msra.mxu0 0.0
        %359 = vmatprep.subr.mxu0 0.0
        %360 = vmatpush1.msra.mxu0 0.0
        %361 = vmatprep.mubr.f32.mxu0 0.0
        %362 = vmatmul.mubr.f32.gmra.mrb[0].mxu0 %v295
        %v363 = vpop.f32.mrb[0].mxu0
        %v364 = vadd.f32 %v291, %v363
        %v365 = vpop.f32.mrb[0].mxu0
        %366 = vdwg.mxu0
        %368 = vrot.lane.b32.xlu0 %v364, 96
        %v369 = vpop.permute.xlu0 %368
        %vm370 = vcmask 130048
        %v371 = vsel %vm370, %v364, 0
        %v373 = vsel %vm370, %v369, 0
        %375 = vmatprep.subr.mxu0 0.0
        %376 = vmatpush1.xpose.msra.mxu0 %v373
        %377 = vmatprep.subr.mxu0 0.0
        %378 = vmatpush1.xpose.msra.mxu0 0.0
        %379 = vmatprep.subr.mxu0 0.0
        %380 = vmatpush1.xpose.msra.mxu0 0.0
        %381 = vmatprep.subr.mxu0 0.0
        %382 = vmatpush1.xpose.msra.mxu0 0.0
        %383 = vmatprep.subr.mxu0 0.0
        %384 = vmatpush1.xpose.msra.mxu0 0.0
        %385 = vmatprep.subr.mxu0 0.0
        %386 = vmatpush1.xpose.msra.mxu0 0.0
        %387 = vmatprep.subr.mxu0 0.0
        %388 = vmatpush1.xpose.msra.mxu0 0.0
        %389 = vmatprep.subr.mxu0 0.0
        %390 = vmatpush1.xpose.msra.mxu0 0.0
        %391 = vmatprep.subr.mxu0 0.0
        %392 = vmatpush1.xpose.msra.mxu0 0.0
        %393 = vmatprep.subr.mxu0 0.0
        %394 = vmatpush1.xpose.msra.mxu0 0.0
        %395 = vmatprep.subr.mxu0 0.0
        %396 = vmatpush1.xpose.msra.mxu0 0.0
        %397 = vmatprep.subr.mxu0 0.0
        %398 = vmatpush1.xpose.msra.mxu0 0.0
        %399 = vmatprep.subr.mxu0 0.0
        %400 = vmatpush1.xpose.msra.mxu0 0.0
        %401 = vmatprep.subr.mxu0 0.0
        %402 = vmatpush1.xpose.msra.mxu0 0.0
        %403 = vmatprep.subr.mxu0 0.0
        %404 = vmatpush1.xpose.msra.mxu0 0.0
        %405 = vmatprep.subr.mxu0 0.0
        %406 = vmatpush1.xpose.msra.mxu0 0.0
        %407 = vmatprep.subr.mxu0 0.0
        %408 = vmatpush1.xpose.msra.mxu0 0.0
        %409 = vmatprep.subr.mxu0 0.0
        %410 = vmatpush1.xpose.msra.mxu0 0.0
        %411 = vmatprep.subr.mxu0 0.0
        %412 = vmatpush1.xpose.msra.mxu0 0.0
        %413 = vmatprep.subr.mxu0 0.0
        %414 = vmatpush1.xpose.msra.mxu0 0.0
        %415 = vmatprep.subr.mxu0 0.0
        %416 = vmatpush1.xpose.msra.mxu0 0.0
        %417 = vmatprep.subr.mxu0 0.0
        %418 = vmatpush1.xpose.msra.mxu0 0.0
        %419 = vmatprep.subr.mxu0 0.0
        %420 = vmatpush1.xpose.msra.mxu0 0.0
        %421 = vmatprep.subr.mxu0 0.0
        %422 = vmatpush1.xpose.msra.mxu0 0.0
        %423 = vmatprep.subr.mxu0 0.0
        %424 = vmatpush1.xpose.msra.mxu0 0.0
        %425 = vmatprep.subr.mxu0 0.0
        %426 = vmatpush1.xpose.msra.mxu0 0.0
        %427 = vmatprep.subr.mxu0 0.0
        %428 = vmatpush1.xpose.msra.mxu0 0.0
        %429 = vmatprep.subr.mxu0 0.0
        %430 = vmatpush1.xpose.msra.mxu0 0.0
        %431 = vmatprep.subr.mxu0 0.0
        %432 = vmatpush1.xpose.msra.mxu0 0.0
        %433 = vmatprep.subr.mxu0 0.0
        %434 = vmatpush1.xpose.msra.mxu0 0.0
        %435 = vmatprep.subr.mxu0 0.0
        %436 = vmatpush1.xpose.msra.mxu0 0.0
        %437 = vmatprep.subr.mxu0 0.0
        %438 = vmatpush1.xpose.msra.mxu0 0.0
        %439 = vmatprep.mubr.f32.mxu0 0.0
        %440 = vmatmul.mubr.f32.gmra.mrb[0].mxu0 %v371
        %v441 = vpop.f32.mrb[0].mxu0
        %v442 = vadd.f32 0.0, %v441
        %v443 = vpop.f32.mrb[0].mxu0
        %444 = vdwg.mxu0
        %v445 = vmul.f32 %v442, 0.25
        %vm446 = vcmask 64512
        %v447 = vsel %vm446, %v445, -inf
        %448 = vmax.xlane.f32.xlu0 %v447
        %v449 = vpop.xlane.xlu0 %448
        %v450 = vsub.f32 %v445, %v449
        %v451 = vmul.f32 %v450, 1.442695
        %v452 = vpow.pop %v451
        %v453 = vsel %vm446, %v452, 0.0
        %454 = vadd.xlane.f32.xlu0 %v453
        %v455 = vpop.xlane.xlu0 %454
        %v456 = vrcp.pop %v455
        %v457 = vmul.f32 %v452, %v456
        %458 = vrot.lane.b32.xlu0 %v364, 64
        %v459 = vpop.permute.xlu0 %458
        %v462 = vsel %vm446, %v457, 0
        %464 = vmatprep.subr.mxu0 0.0
        %465 = vmatpush1.msra.mxu0 %v459
        %466 = vmatprep.subr.mxu0 0.0
        %467 = vmatpush1.msra.mxu0 0.0
        %468 = vmatprep.subr.mxu0 0.0
        %469 = vmatpush1.msra.mxu0 0.0
        %470 = vmatprep.subr.mxu0 0.0
        %471 = vmatpush1.msra.mxu0 0.0
        %472 = vmatprep.subr.mxu0 0.0
        %473 = vmatpush1.msra.mxu0 0.0
        %474 = vmatprep.subr.mxu0 0.0
        %475 = vmatpush1.msra.mxu0 0.0
        %476 = vmatprep.subr.mxu0 0.0
        %477 = vmatpush1.msra.mxu0 0.0
        %478 = vmatprep.subr.mxu0 0.0
        %479 = vmatpush1.msra.mxu0 0.0
        %480 = vmatprep.subr.mxu0 0.0
        %481 = vmatpush1.msra.mxu0 0.0
        %482 = vmatprep.subr.mxu0 0.0
        %483 = vmatpush1.msra.mxu0 0.0
        %484 = vmatprep.subr.mxu0 0.0
        %485 = vmatpush1.msra.mxu0 0.0
        %486 = vmatprep.subr.mxu0 0.0
        %487 = vmatpush1.msra.mxu0 0.0
        %488 = vmatprep.subr.mxu0 0.0
        %489 = vmatpush1.msra.mxu0 0.0
        %490 = vmatprep.subr.mxu0 0.0
        %491 = vmatpush1.msra.mxu0 0.0
        %492 = vmatprep.subr.mxu0 0.0
        %493 = vmatpush1.msra.mxu0 0.0
        %494 = vmatprep.subr.mxu0 0.0
        %495 = vmatpush1.msra.mxu0 0.0
        %496 = vmatprep.subr.mxu0 0.0
        %497 = vmatpush1.msra.mxu0 0.0
        %498 = vmatprep.subr.mxu0 0.0
        %499 = vmatpush1.msra.mxu0 0.0
        %500 = vmatprep.subr.mxu0 0.0
        %501 = vmatpush1.msra.mxu0 0.0
        %502 = vmatprep.subr.mxu0 0.0
        %503 = vmatpush1.msra.mxu0 0.0
        %504 = vmatprep.subr.mxu0 0.0
        %505 = vmatpush1.msra.mxu0 0.0
        %506 = vmatprep.subr.mxu0 0.0
        %507 = vmatpush1.msra.mxu0 0.0
        %508 = vmatprep.subr.mxu0 0.0
        %509 = vmatpush1.msra.mxu0 0.0
        %510 = vmatprep.subr.mxu0 0.0
        %511 = vmatpush1.msra.mxu0 0.0
        %512 = vmatprep.subr.mxu0 0.0
        %513 = vmatpush1.msra.mxu0 0.0
        %514 = vmatprep.subr.mxu0 0.0
        %515 = vmatpush1.msra.mxu0 0.0
        %516 = vmatprep.subr.mxu0 0.0
        %517 = vmatpush1.msra.mxu0 0.0
        %518 = vmatprep.subr.mxu0 0.0
        %519 = vmatpush1.msra.mxu0 0.0
        %520 = vmatprep.subr.mxu0 0.0
        %521 = vmatpush1.msra.mxu0 0.0
        %522 = vmatprep.subr.mxu0 0.0
        %523 = vmatpush1.msra.mxu0 0.0
        %524 = vmatprep.subr.mxu0 0.0
        %525 = vmatpush1.msra.mxu0 0.0
        %526 = vmatprep.subr.mxu0 0.0
        %527 = vmatpush1.msra.mxu0 0.0
        %528 = vmatprep.mubr.f32.mxu0 0.0
        %529 = vmatmul.mubr.f32.gmra.mrb[0].mxu0 %v462
        %v530 = vpop.f32.mrb[0].mxu0
        %v531 = vadd.f32 0.0, %v530
        %v532 = vpop.f32.mrb[0].mxu0
        %533 = vdwg.mxu0
        %534 = vrot.lane.b32.xlu0 %v364, 112
        %v535 = vpop.permute.xlu0 %534
        %536 = vrot.lane.b32.xlu0 %v364, 80
        %v537 = vpop.permute.xlu0 %536
        %v538 = vsel %vm370, %v535, 0
        %v540 = vsel %vm370, %v537, 0
        %542 = vmatprep.subr.mxu0 0.0
        %543 = vmatpush1.xpose.msra.mxu0 %v540
        %544 = vmatprep.subr.mxu0 0.0
        %545 = vmatpush1.xpose.msra.mxu0 0.0
        %546 = vmatprep.subr.mxu0 0.0
        %547 = vmatpush1.xpose.msra.mxu0 0.0
        %548 = vmatprep.subr.mxu0 0.0
        %549 = vmatpush1.xpose.msra.mxu0 0.0
        %550 = vmatprep.subr.mxu0 0.0
        %551 = vmatpush1.xpose.msra.mxu0 0.0
        %552 = vmatprep.subr.mxu0 0.0
        %553 = vmatpush1.xpose.msra.mxu0 0.0
        %554 = vmatprep.subr.mxu0 0.0
        %555 = vmatpush1.xpose.msra.mxu0 0.0
        %556 = vmatprep.subr.mxu0 0.0
        %557 = vmatpush1.xpose.msra.mxu0 0.0
        %558 = vmatprep.subr.mxu0 0.0
        %559 = vmatpush1.xpose.msra.mxu0 0.0
        %560 = vmatprep.subr.mxu0 0.0
        %561 = vmatpush1.xpose.msra.mxu0 0.0
        %562 = vmatprep.subr.mxu0 0.0
        %563 = vmatpush1.xpose.msra.mxu0 0.0
        %564 = vmatprep.subr.mxu0 0.0
        %565 = vmatpush1.xpose.msra.mxu0 0.0
        %566 = vmatprep.subr.mxu0 0.0
        %567 = vmatpush1.xpose.msra.mxu0 0.0
        %568 = vmatprep.subr.mxu0 0.0
        %569 = vmatpush1.xpose.msra.mxu0 0.0
        %570 = vmatprep.subr.mxu0 0.0
        %571 = vmatpush1.xpose.msra.mxu0 0.0
        %572 = vmatprep.subr.mxu0 0.0
        %573 = vmatpush1.xpose.msra.mxu0 0.0
        %574 = vmatprep.subr.mxu0 0.0
        %575 = vmatpush1.xpose.msra.mxu0 0.0
        %576 = vmatprep.subr.mxu0 0.0
        %577 = vmatpush1.xpose.msra.mxu0 0.0
        %578 = vmatprep.subr.mxu0 0.0
        %579 = vmatpush1.xpose.msra.mxu0 0.0
        %580 = vmatprep.subr.mxu0 0.0
        %581 = vmatpush1.xpose.msra.mxu0 0.0
        %582 = vmatprep.subr.mxu0 0.0
        %583 = vmatpush1.xpose.msra.mxu0 0.0
        %584 = vmatprep.subr.mxu0 0.0
        %585 = vmatpush1.xpose.msra.mxu0 0.0
        %586 = vmatprep.subr.mxu0 0.0
        %587 = vmatpush1.xpose.msra.mxu0 0.0
        %588 = vmatprep.subr.mxu0 0.0
        %589 = vmatpush1.xpose.msra.mxu0 0.0
        %590 = vmatprep.subr.mxu0 0.0
        %591 = vmatpush1.xpose.msra.mxu0 0.0
        %592 = vmatprep.subr.mxu0 0.0
        %593 = vmatpush1.xpose.msra.mxu0 0.0
        %594 = vmatprep.subr.mxu0 0.0
        %595 = vmatpush1.xpose.msra.mxu0 0.0
        %596 = vmatprep.subr.mxu0 0.0
        %597 = vmatpush1.xpose.msra.mxu0 0.0
        %598 = vmatprep.subr.mxu0 0.0
        %599 = vmatpush1.xpose.msra.mxu0 0.0
        %600 = vmatprep.subr.mxu0 0.0
        %601 = vmatpush1.xpose.msra.mxu0 0.0
        %602 = vmatprep.subr.mxu0 0.0
        %603 = vmatpush1.xpose.msra.mxu0 0.0
        %604 = vmatprep.subr.mxu0 0.0
        %605 = vmatpush1.xpose.msra.mxu0 0.0
        %606 = vmatprep.mubr.f32.mxu0 0.0
        %607 = vmatmul.mubr.f32.gmra.mrb[0].mxu0 %v538
        %v608 = vpop.f32.mrb[0].mxu0
        %v609 = vadd.f32 0.0, %v608
        %v610 = vpop.f32.mrb[0].mxu0
        %611 = vdwg.mxu0
        %v612 = vmul.f32 %v609, 0.25
        %v613 = vsel %vm446, %v612, -inf
        %614 = vmax.xlane.f32.xlu0 %v613
        %v615 = vpop.xlane.xlu0 %614
        %v616 = vsub.f32 %v612, %v615
        %v617 = vmul.f32 %v616, 1.442695
        %v618 = vpow.pop %v617
        %v619 = vsel %vm446, %v618, 0.0
        %620 = vadd.xlane.f32.xlu0 %v619
        %v621 = vpop.xlane.xlu0 %620
        %v622 = vrcp.pop %v621
        %v623 = vmul.f32 %v618, %v622
        %624 = vrot.lane.b32.xlu0 %v364, 48
        %v625 = vpop.permute.xlu0 %624
        %v628 = vsel %vm446, %v623, 0
        %630 = vmatprep.subr.mxu0 0.0
        %631 = vmatpush1.msra.mxu0 %v625
        %632 = vmatprep.subr.mxu0 0.0
        %633 = vmatpush1.msra.mxu0 0.0
        %634 = vmatprep.subr.mxu0 0.0
        %635 = vmatpush1.msra.mxu0 0.0
        %636 = vmatprep.subr.mxu0 0.0
        %637 = vmatpush1.msra.mxu0 0.0
        %638 = vmatprep.subr.mxu0 0.0
        %639 = vmatpush1.msra.mxu0 0.0
        %640 = vmatprep.subr.mxu0 0.0
        %641 = vmatpush1.msra.mxu0 0.0
        %642 = vmatprep.subr.mxu0 0.0
        %643 = vmatpush1.msra.mxu0 0.0
        %644 = vmatprep.subr.mxu0 0.0
        %645 = vmatpush1.msra.mxu0 0.0
        %646 = vmatprep.subr.mxu0 0.0
        %647 = vmatpush1.msra.mxu0 0.0
        %648 = vmatprep.subr.mxu0 0.0
        %649 = vmatpush1.msra.mxu0 0.0
        %650 = vmatprep.subr.mxu0 0.0
        %651 = vmatpush1.msra.mxu0 0.0
        %652 = vmatprep.subr.mxu0 0.0
        %653 = vmatpush1.msra.mxu0 0.0
        %654 = vmatprep.subr.mxu0 0.0
        %655 = vmatpush1.msra.mxu0 0.0
        %656 = vmatprep.subr.mxu0 0.0
        %657 = vmatpush1.msra.mxu0 0.0
        %658 = vmatprep.subr.mxu0 0.0
        %659 = vmatpush1.msra.mxu0 0.0
        %660 = vmatprep.subr.mxu0 0.0
        %661 = vmatpush1.msra.mxu0 0.0
        %662 = vmatprep.subr.mxu0 0.0
        %663 = vmatpush1.msra.mxu0 0.0
        %664 = vmatprep.subr.mxu0 0.0
        %665 = vmatpush1.msra.mxu0 0.0
        %666 = vmatprep.subr.mxu0 0.0
        %667 = vmatpush1.msra.mxu0 0.0
        %668 = vmatprep.subr.mxu0 0.0
        %669 = vmatpush1.msra.mxu0 0.0
        %670 = vmatprep.subr.mxu0 0.0
        %671 = vmatpush1.msra.mxu0 0.0
        %672 = vmatprep.subr.mxu0 0.0
        %673 = vmatpush1.msra.mxu0 0.0
        %674 = vmatprep.subr.mxu0 0.0
        %675 = vmatpush1.msra.mxu0 0.0
        %676 = vmatprep.subr.mxu0 0.0
        %677 = vmatpush1.msra.mxu0 0.0
        %678 = vmatprep.subr.mxu0 0.0
        %679 = vmatpush1.msra.mxu0 0.0
        %680 = vmatprep.subr.mxu0 0.0
        %681 = vmatpush1.msra.mxu0 0.0
        %682 = vmatprep.subr.mxu0 0.0
        %683 = vmatpush1.msra.mxu0 0.0
        %684 = vmatprep.subr.mxu0 0.0
        %685 = vmatpush1.msra.mxu0 0.0
        %686 = vmatprep.subr.mxu0 0.0
        %687 = vmatpush1.msra.mxu0 0.0
        %688 = vmatprep.subr.mxu0 0.0
        %689 = vmatpush1.msra.mxu0 0.0
        %690 = vmatprep.subr.mxu0 0.0
        %691 = vmatpush1.msra.mxu0 0.0
        %692 = vmatprep.subr.mxu0 0.0
        %693 = vmatpush1.msra.mxu0 0.0
        %694 = vmatprep.mubr.f32.mxu0 0.0
        %695 = vmatmul.mubr.f32.gmra.mrb[0].mxu0 %v628
        %v696 = vpop.f32.mrb[0].mxu0
        %v697 = vadd.f32 0.0, %v696
        %v698 = vpop.f32.mrb[0].mxu0
        %699 = vdwg.mxu0
        %701 = vrot.lane.b32.xlu0 %v697, 16
        %v702 = vpop.permute.xlu0 %701
        %v704 = vsel %vm370, %v531, %v702
        %705 = vst.msk [vmem:[%s280] sm:$0xff] %vm293, %v704
        %s706 = sand.u32 %s142, 1
        %s707 = scalar_lea.sflag [#allocation4], %s706
        %s708 = sand.u32 %s142, 1
        %s709 = smul.addr %s708, 8
        %s710 = scalar_lea.vmem [#allocation8], %s709
        // Predicated region
        $region49: #{tpu_custom_call.1} parent=35 // pred_check
          %p711 = pneg %p152
        $region50: #{tpu_custom_call.1} parent=35 // pred_check_branch
          %713 = sbr.rel (%p711) target = $region52
        $region51: #{tpu_custom_call.1} parent=35 // pred_region
          %s715 = ssub.s32 128, 128
          %716 = vsyncadd %s707, %s715
          %s717 = sadd.s32 %s29, %s28
          %s718 = smul.addr %s717, 128
          %s719 = scalar_lea.hbm %s4, %s718
          %s721 = sshll.u32 %s710, 4
          %s722 = int_to_ptr.vmem [resolvable:$true] %s721
          %724 = dma.vmem_to_hbm [thread:$0]  %s722, 128, %s719, %s707
        $region52: #{tpu_custom_call.1} parent=35 // pred_fallthru
          _
      $region36: #{tpu_custom_call.1} parent=5 // pred_fallthru
        _
      %p725 = scmp.le.s32.totalorder 2, %s19
      // Predicated region
      $region53: #{tpu_custom_call.1} parent=5 // pred_check
        %p726 = pneg %p725
      $region54: #{tpu_custom_call.1} parent=5 // pred_check_branch
        %728 = sbr.rel (%p726) target = $region56
      $region55: #{tpu_custom_call.1} parent=5 // pred_region
        %s729 = ssub.s32 %s19, 2
        // Predicated region
        $region57: #{tpu_custom_call.1} parent=55 // pred_check
          %p730 = pneg %p158
        $region58: #{tpu_custom_call.1} parent=55 // pred_check_branch
          %732 = sbr.rel (%p730) target = $region60
        $region59: #{tpu_custom_call.1} parent=55 // pred_region
          %s733 = sand.u32 %s143, 1
          %s734 = scalar_lea.sflag [#allocation4], %s733
          %s735 = sand.u32 %s143, 1
          %s736 = smul.addr %s735, 8
          %s737 = scalar_lea.vmem [#allocation8], %s736
          %738 = dma.done %s734, 128
        $region60: #{tpu_custom_call.1} parent=55 // pred_fallthru
          _
      $region56: #{tpu_custom_call.1} parent=5 // pred_fallthru
        _
    $region6: #{tpu_custom_call.1} parent=1 // loop_footer
      %s23 = sadd.s32 1, %s19
    $region7: #{tpu_custom_call.1} parent=1 // loop_footer_branch
      %18 = sbr.rel target = $region3
    $region8: #{tpu_custom_call.1} parent=1 // loop_exit
      _
    %739 = vsyncpa [#allocation3], 1
    %s740 = scalar_lea.sflag [#allocation3], 1
    %741 = vsyncpa %s740, 1
    %742 = vsyncpa [#allocation6], 1
    %s743 = scalar_lea.sflag [#allocation6], 1
    %744 = vsyncpa %s743, 1
    %745 = vsyncpa [#allocation4], 1
    %s746 = scalar_lea.sflag [#allocation4], 1
    %747 = vsyncpa %s746, 1

</llo_original>
